<compile_context>
chip_gen: v7x
topology: tpu7x:2x2x1
jax: 0.10.0
libtpu: 0.0.40
codegen_flags: <defaults>
</compile_context>

<pallas_src>
import functools

import jax
import jax.numpy as jnp
from jax.experimental import pallas as pl
from jax.experimental.pallas import tpu as pltpu


def _conv_bn_relu_kernel(x_ref, w_ref, b_ref, o_ref, xpad_ref, *, T, K, pad, bN, nct_io):
    """One grid step: bN batch elements, full time axis, ONE fused MXU matmul.

    nct_io=True : x_ref (bN, C_in, T), o_ref (bN, C_out, T)   (PyTorch NCT blocks)
    nct_io=False: x_ref (bN, T, C_in), o_ref (bN, T, C_out)   (channels-last NTC)
    w_ref   : (K*C_in, C_out)   conv weights with BN scale folded, im2col row order
    b_ref   : (1, C_out)        folded bias = (conv_b - mean) * scale + beta
    xpad_ref: (bN, T+K-1, C_in) VMEM scratch holding the zero-padded time axis
    """
    c_in = xpad_ref.shape[-1]

    x = x_ref[...]
    if nct_io:
        # Tiny tile transpose on the in-kernel XLU instead of a wrapper transpose
        # (which would be a full extra HBM read+write of the activations).
        x = jnp.swapaxes(x, 1, 2)                       # (bN, T, C_in)

    # 'same' padding entirely in VMEM: zero the halo rows (tiny) + ONE interior
    # store for all bN slabs.  Halos are re-zeroed every step because with megacore
    # "parallel" partitioning each core owns its own scratch instance.
    if pad > 0:
        xpad_ref[:, 0:pad, :] = jnp.zeros((bN, pad, c_in), xpad_ref.dtype)
        xpad_ref[:, pad + T:, :] = jnp.zeros((bN, K - 1 - pad, c_in), xpad_ref.dtype)
    xpad_ref[:, pad:pad + T, :] = x.astype(xpad_ref.dtype)

    # Batched im2col unfold -> ONE MXU matmul with M = bN*T, contraction K*C_in.
    # TODO(synk): the (bN, T, KC) -> (bN*T, KC) collapse is free when T % 8 == 0.
    unf = jnp.concatenate([xpad_ref[:, k:k + T, :] for k in range(K)], axis=-1)
    acc = jnp.dot(unf.reshape(bN * T, K * c_in), w_ref[...],
                  preferred_element_type=jnp.float32)   # (bN*T, C_out) f32
    y = jnp.maximum(acc + b_ref[...], 0.0)              # folded conv-bias + BN + ReLU
    y = y.reshape(bN, T, -1)                            # Dropout = identity (eval)
    if nct_io:
        o_ref[...] = jnp.swapaxes(y, 1, 2).astype(o_ref.dtype)   # write NCT directly
    else:
        o_ref[...] = y.astype(o_ref.dtype)


def _fold_params(weight, conv_bias, gamma, beta, running_mean, running_var, eps,
                 compute_dtype):
    """Fold BatchNorm1d (eval) into the conv weights/bias; im2col weight layout."""
    C_out, C_in, K = weight.shape
    scale = (gamma / jnp.sqrt(running_var + eps)).astype(jnp.float32)          # (C_out,)
    bias = ((conv_bias - running_mean) * scale + beta).astype(jnp.float32)     # (C_out,)
    w = weight.astype(jnp.float32) * scale[:, None, None]                      # BN scale -> W
    # row (k*C_in + ci) -> output channel co  (matches the in-kernel lane concat)
    w2 = jnp.transpose(w, (2, 1, 0)).reshape(K * C_in, C_out).astype(compute_dtype)
    return w2, bias.reshape(1, C_out)


def _vmem_capacity_bytes():
    try:
        return int(pltpu.get_tpu_info().vmem_capacity_bytes)
    except Exception:
        return 64 * 1024 * 1024        # conservative (v7x-sized) default


def _pick_block_batch(N, C_in, C_out, T, K, compute_dtype, vmem_cap):
    """Choose bN (batch elems per grid step) and the padded batch size Npad."""
    db = jnp.dtype(compute_dtype).itemsize
    Tp = T + K - 1
    # Per-element working set: double-buffered in/out blocks + padded scratch.
    per_n = 2 * T * C_in * db + 2 * T * C_out * 4 + Tp * C_in * db
    const = K * C_in * C_out * db + C_out * 4            # resident weights + bias
    budget = int(0.40 * vmem_cap)                        # generation-aware tile budget
    bn = max(1, (budget - const) // max(1, per_n))
    bn = min(bn, max(1, 8192 // max(1, T)))              # keep single DMAs / matmul sane
    if N > 1:
        bn = min(bn, pl.cdiv(N, 2))                      # >=2 grid steps (v7x: 2 cores)
    bn = max(1, min(bn, N))
    # Prefer an exact divisor of N near the cap (skips the batch-pad copy); else pad N.
    for d in range(bn, 0, -1):
        if N % d == 0:
            if 4 * d >= 3 * bn:
                return d, N
            break
    return bn, pl.cdiv(N, bn) * bn


def _make_call(nct_io, Npad, C_in, C_out, T, K, bN, compute_dtype, vmem_limit):
    pad, Tp = K // 2, T + K - 1
    kern = functools.partial(_conv_bn_relu_kernel, T=T, K=K, pad=pad, bN=bN,
                             nct_io=nct_io)
    if nct_io:
        x_block, o_block = (bN, C_in, T), (bN, C_out, T)
        out_shape = jax.ShapeDtypeStruct((Npad, C_out, T), jnp.float32)
    else:
        x_block, o_block = (bN, T, C_in), (bN, T, C_out)
        out_shape = jax.ShapeDtypeStruct((Npad, T, C_out), jnp.float32)
    return pl.pallas_call(
        kern,
        out_shape=out_shape,
        grid_spec=pltpu.PrefetchScalarGridSpec(
            num_scalar_prefetch=0,
            grid=(Npad // bN,),
            in_specs=[
                pl.BlockSpec(x_block, lambda i: (i, 0, 0)),
                pl.BlockSpec((K * C_in, C_out), lambda i: (0, 0)),   # resident weights
                pl.BlockSpec((1, C_out), lambda i: (0, 0)),          # resident bias
            ],
            out_specs=pl.BlockSpec(o_block, lambda i: (i, 0, 0)),
            scratch_shapes=[pltpu.VMEM((bN, Tp, C_in), compute_dtype)],
        ),
        compiler_params=pltpu.CompilerParams(
            dimension_semantics=("parallel",),
            vmem_limit_bytes=int(vmem_limit),
        ),
    )


def conv1d_bn_relu_dropout_ntc(x_ntc, weight, conv_bias, gamma, beta,
                               running_mean, running_var, *, eps=1e-5,
                               compute_dtype=jnp.float32):
    """Channels-last entry point: x (N, T, C_in) -> (N, T, C_out).

    Preferred when stacking TempCNN blocks: keeping activations NTC between layers
    removes all layout transposes entirely."""
    N, T, C_in = x_ntc.shape
    C_out, _, K = weight.shape
    if K % 2 != 1:
        raise ValueError("Only odd kernel_size is supported (padding=K//2 'same' conv).")
    w2, b2 = _fold_params(weight, conv_bias, gamma, beta, running_mean, running_var,
                          eps, compute_dtype)
    vmem_cap = _vmem_capacity_bytes()
    vmem_limit = max(32 << 20, min(int(0.75 * vmem_cap), 100 << 20))
    bN, Npad = _pick_block_batch(N, C_in, C_out, T, K, compute_dtype, vmem_cap)
    x = x_ntc.astype(compute_dtype)
    if Npad != N:
        x = jnp.pad(x, ((0, Npad - N), (0, 0), (0, 0)))
    out = _make_call(False, Npad, C_in, C_out, T, K, bN, compute_dtype, vmem_limit)(x, w2, b2)
    return out[:N] if Npad != N else out


def conv1d_bn_relu_dropout(x_nct, weight, conv_bias, gamma, beta,
                           running_mean, running_var, *, eps=1e-5,
                           compute_dtype=jnp.float32):
    """PyTorch-layout entry point: x (N, C_in, T) -> (N, C_out, T) (eval semantics)."""
    N, C_in, T = x_nct.shape
    C_out, _, K = weight.shape
    if K % 2 != 1:
        raise ValueError("Only odd kernel_size is supported (padding=K//2 'same' conv).")
    w2, b2 = _fold_params(weight, conv_bias, gamma, beta, running_mean, running_var,
                          eps, compute_dtype)
    vmem_cap = _vmem_capacity_bytes()
    vmem_limit = max(32 << 20, min(int(0.75 * vmem_cap), 100 << 20))
    bN, Npad = _pick_block_batch(N, C_in, C_out, T, K, compute_dtype, vmem_cap)

    x = x_nct.astype(compute_dtype)
    if Npad != N:
        x = jnp.pad(x, ((0, Npad - N), (0, 0), (0, 0)))

    try:
        # Primary: NCT blocks in/out with in-kernel tile transposes -> no wrapper
        # transposes, no extra HBM round trips of the activations.
        out = _make_call(True, Npad, C_in, C_out, T, K, bN, compute_dtype,
                         vmem_limit)(x, w2, b2)
        out = jax.block_until_ready(out)                 # surface lowering errors here
    except Exception:
        # Fallback: channels-last kernel + XLA boundary transposes (always lowers).
        x_ntc = jnp.transpose(x, (0, 2, 1))
        out_ntc = _make_call(False, Npad, C_in, C_out, T, K, bN, compute_dtype,
                             vmem_limit)(x_ntc, w2, b2)
        out = jax.block_until_ready(jnp.transpose(out_ntc, (0, 2, 1)))
    return out[:N] if Npad != N else out


def _reference(x_nct, weight, conv_bias, gamma, beta, mean, var, eps=1e-5):
    pad = weight.shape[-1] // 2
    z = jax.lax.conv_general_dilated(
        x_nct, weight, window_strides=(1,), padding=[(pad, pad)],
        dimension_numbers=("NCH", "OIH", "NCH"))
    z = z + conv_bias[None, :, None]
    z = (z - mean[None, :, None]) / jnp.sqrt(var[None, :, None] + eps)
    z = z * gamma[None, :, None] + beta[None, :, None]
    return jnp.maximum(z, 0.0)


if __name__ == "__main__":
    # Module hyper-params (small, consistent with the forward pass)
    batch, input_dim, seq_len = 2, 4, 16
    hidden_dims, kernel_size = 32, 5

    key = jax.random.PRNGKey(0)
    kx, kw, kb, kg, kbe, km, kv = jax.random.split(key, 7)

    x = jax.random.normal(kx, (batch, input_dim, seq_len), dtype=jnp.float32)
    weight = 0.1 * jax.random.normal(
        kw, (hidden_dims, input_dim, kernel_size), dtype=jnp.float32)
    conv_bias = 0.1 * jax.random.normal(kb, (hidden_dims,), dtype=jnp.float32)

    # Non-trivial BatchNorm1d statistics (eval mode) to exercise the folding.
    gamma = 1.0 + 0.1 * jax.random.normal(kg, (hidden_dims,), dtype=jnp.float32)
    beta = 0.1 * jax.random.normal(kbe, (hidden_dims,), dtype=jnp.float32)
    running_mean = 0.1 * jax.random.normal(km, (hidden_dims,), dtype=jnp.float32)
    running_var = 0.5 + jax.random.uniform(kv, (hidden_dims,), dtype=jnp.float32)

    out = conv1d_bn_relu_dropout(
        x, weight, conv_bias, gamma, beta, running_mean, running_var)
    out = jax.block_until_ready(out)

    ref = _reference(x, weight, conv_bias, gamma, beta, running_mean, running_var)
    assert out.shape == (batch, hidden_dims, seq_len)
    assert jnp.allclose(out, ref, atol=1e-4, rtol=1e-4), "mismatch vs reference"

    # Also exercise the channels-last entry point used when stacking TempCNN layers.
    out_ntc = conv1d_bn_relu_dropout_ntc(
        jnp.transpose(x, (0, 2, 1)), weight, conv_bias, gamma, beta,
        running_mean, running_var)
    out_ntc = jax.block_until_ready(out_ntc)
    assert jnp.allclose(jnp.transpose(out_ntc, (0, 2, 1)), ref, atol=1e-4, rtol=1e-4), \
        "NTC entry point mismatch vs reference"

    print("KERNEL_OK")
</pallas_src>

<mosaic_0001>
module attributes {stable_mosaic.version = 11 : i64} {
  func.func @_conv_bn_relu_kernel(%arg0: i32, %arg1: memref<1x4x16xf32, #tpu.memory_space<vmem>>, %arg2: memref<20x32xf32, #tpu.memory_space<vmem>>, %arg3: memref<1x32xf32, #tpu.memory_space<vmem>>, %arg4: memref<1x32x16xf32, #tpu.memory_space<vmem>>, %arg5: memref<1x20x4xf32, #tpu.memory_space<vmem>>) attributes {dimension_semantics = [#tpu.dimension_semantics<parallel>], iteration_bounds = array<i64: 2>, scalar_prefetch = 0 : i64, scratch_operands = 1 : i64, tpu.core_type = #tpu.core_type<tc>, window_params = [{transform_indices = @transform_0, window_bounds = array<i64: 1, 4, 16>}, {pipeline_mode = #tpu.pipeline_mode<synchronous>, transform_indices = @transform_1, window_bounds = array<i64: 20, 32>}, {pipeline_mode = #tpu.pipeline_mode<synchronous>, transform_indices = @transform_2, window_bounds = array<i64: 1, 32>}, {transform_indices = @transform_3, window_bounds = array<i64: 1, 32, 16>}]} {
    %c0 = arith.constant 0 : index
    %c0_0 = arith.constant 0 : index
    %c0_1 = arith.constant 0 : index
    %0 = vector.load %arg1[%c0, %c0_0, %c0_1] : memref<1x4x16xf32, #tpu.memory_space<vmem>>, vector<1x4x16xf32>
    %1 = tpu.transpose %0, [0, 2, 1] : vector<1x4x16xf32> -> vector<1x16x4xf32>
    %cst = arith.constant 0.000000e+00 : f32
    %2 = vector.broadcast %cst : f32 to vector<1x2x4xf32>
    %c0_2 = arith.constant 0 : index
    %c0_3 = arith.constant 0 : index
    %c0_4 = arith.constant 0 : index
    %3 = vector.load %arg5[%c0_2, %c0_3, %c0_4] : memref<1x20x4xf32, #tpu.memory_space<vmem>>, vector<1x2x4xf32>
    tpu.vector_store %arg5[%c0_2, %c0_3, %c0_4], %2 {strides = array<i32>} : memref<1x20x4xf32, #tpu.memory_space<vmem>>, vector<1x2x4xf32>,
    %cst_5 = arith.constant 0.000000e+00 : f32
    %4 = vector.broadcast %cst_5 : f32 to vector<1x2x4xf32>
    %c0_6 = arith.constant 0 : index
    %c18 = arith.constant 18 : index
    %c0_7 = arith.constant 0 : index
    %5 = vector.load %arg5[%c0_6, %c18, %c0_7] : memref<1x20x4xf32, #tpu.memory_space<vmem>>, vector<1x2x4xf32>
    tpu.vector_store %arg5[%c0_6, %c18, %c0_7], %4 {strides = array<i32>} : memref<1x20x4xf32, #tpu.memory_space<vmem>>, vector<1x2x4xf32>,
    %c0_8 = arith.constant 0 : index
    %c2 = arith.constant 2 : index
    %c0_9 = arith.constant 0 : index
    %6 = vector.load %arg5[%c0_8, %c2, %c0_9] : memref<1x20x4xf32, #tpu.memory_space<vmem>>, vector<1x16x4xf32>
    tpu.vector_store %arg5[%c0_8, %c2, %c0_9], %1 {strides = array<i32>} : memref<1x20x4xf32, #tpu.memory_space<vmem>>, vector<1x16x4xf32>,
    %c0_10 = arith.constant 0 : index
    %c0_11 = arith.constant 0 : index
    %c0_12 = arith.constant 0 : index
    %7 = vector.load %arg5[%c0_10, %c0_11, %c0_12] : memref<1x20x4xf32, #tpu.memory_space<vmem>>, vector<1x16x4xf32>
    %c0_13 = arith.constant 0 : index
    %c1 = arith.constant 1 : index
    %c0_14 = arith.constant 0 : index
    %8 = vector.load %arg5[%c0_13, %c1, %c0_14] : memref<1x20x4xf32, #tpu.memory_space<vmem>>, vector<1x16x4xf32>
    %c0_15 = arith.constant 0 : index
    %c2_16 = arith.constant 2 : index
    %c0_17 = arith.constant 0 : index
    %9 = vector.load %arg5[%c0_15, %c2_16, %c0_17] : memref<1x20x4xf32, #tpu.memory_space<vmem>>, vector<1x16x4xf32>
    %c0_18 = arith.constant 0 : index
    %c3 = arith.constant 3 : index
    %c0_19 = arith.constant 0 : index
    %10 = vector.load %arg5[%c0_18, %c3, %c0_19] : memref<1x20x4xf32, #tpu.memory_space<vmem>>, vector<1x16x4xf32>
    %c0_20 = arith.constant 0 : index
    %c4 = arith.constant 4 : index
    %c0_21 = arith.constant 0 : index
    %11 = vector.load %arg5[%c0_20, %c4, %c0_21] : memref<1x20x4xf32, #tpu.memory_space<vmem>>, vector<1x16x4xf32>
    %12 = tpu.concatenate %7, %8, %9, %10, %11 in 2 : vector<1x16x4xf32>, vector<1x16x4xf32>, vector<1x16x4xf32>, vector<1x16x4xf32>, vector<1x16x4xf32> -> vector<1x16x20xf32>
    %13 = vector.shape_cast %12 : vector<1x16x20xf32> to vector<16x20xf32>
    %c0_22 = arith.constant 0 : index
    %c0_23 = arith.constant 0 : index
    %14 = vector.load %arg2[%c0_22, %c0_23] : memref<20x32xf32, #tpu.memory_space<vmem>>, vector<20x32xf32>
    %cst_24 = arith.constant dense<0.000000e+00> : vector<16x32xf32>
    %15 = tpu.matmul %13, %14, %cst_24 {dimension_numbers = #tpu.dot_dimension_numbers<[1], [0], [0], [1], [0, 0, 1, 1], [], []>} : vector<16x20xf32>, vector<20x32xf32>, vector<16x32xf32> -> vector<16x32xf32>
    %c0_25 = arith.constant 0 : index
    %c0_26 = arith.constant 0 : index
    %16 = vector.load %arg3[%c0_25, %c0_26] : memref<1x32xf32, #tpu.memory_space<vmem>>, vector<1x32xf32>
    %17 = vector.broadcast %16 : vector<1x32xf32> to vector<16x32xf32>
    %18 = arith.addf %15, %17 : vector<16x32xf32>
    %cst_27 = arith.constant 0.000000e+00 : f32
    %19 = vector.broadcast %cst_27 : f32 to vector<16x32xf32>
    %20 = arith.maximumf %18, %19 : vector<16x32xf32>
    %21 = vector.shape_cast %20 : vector<16x32xf32> to vector<1x16x32xf32>
    %22 = tpu.transpose %21, [0, 2, 1] : vector<1x16x32xf32> -> vector<1x32x16xf32>
    %c0_28 = arith.constant 0 : index
    %c0_29 = arith.constant 0 : index
    %c0_30 = arith.constant 0 : index
    %23 = vector.load %arg4[%c0_28, %c0_29, %c0_30] : memref<1x32x16xf32, #tpu.memory_space<vmem>>, vector<1x32x16xf32>
    tpu.vector_store %arg4[%c0_28, %c0_29, %c0_30], %22 {strides = array<i32>} : memref<1x32x16xf32, #tpu.memory_space<vmem>>, vector<1x32x16xf32>,
    return
  }
  func.func @transform_0(%arg0: i32) -> (i32, i32, i32) {
    %c0_i32 = arith.constant 0 : i32
    %c0_i32_0 = arith.constant 0 : i32
    %c0_i32_1 = arith.constant 0 : i32
    return %arg0, %c0_i32, %c0_i32_0 : i32, i32, i32
  }
  func.func @transform_1(%arg0: i32) -> (i32, i32) {
    %c0_i32 = arith.constant 0 : i32
    %c0_i32_0 = arith.constant 0 : i32
    %c0_i32_1 = arith.constant 0 : i32
    return %c0_i32, %c0_i32_0 : i32, i32
  }
  func.func @transform_2(%arg0: i32) -> (i32, i32) {
    %c0_i32 = arith.constant 0 : i32
    %c0_i32_0 = arith.constant 0 : i32
    %c0_i32_1 = arith.constant 0 : i32
    return %c0_i32, %c0_i32_0 : i32, i32
  }
  func.func @transform_3(%arg0: i32) -> (i32, i32, i32) {
    %c0_i32 = arith.constant 0 : i32
    %c0_i32_0 = arith.constant 0 : i32
    %c0_i32_1 = arith.constant 0 : i32
    return %arg0, %c0_i32, %c0_i32_0 : i32, i32, i32
  }
}

module attributes {stable_mosaic.version = 11 : i64} {
  func.func @_conv_bn_relu_kernel(%arg0: i32, %arg1: memref<1x16x4xf32, #tpu.memory_space<vmem>>, %arg2: memref<20x32xf32, #tpu.memory_space<vmem>>, %arg3: memref<1x32xf32, #tpu.memory_space<vmem>>, %arg4: memref<1x16x32xf32, #tpu.memory_space<vmem>>, %arg5: memref<1x20x4xf32, #tpu.memory_space<vmem>>) attributes {dimension_semantics = [#tpu.dimension_semantics<parallel>], iteration_bounds = array<i64: 2>, scalar_prefetch = 0 : i64, scratch_operands = 1 : i64, tpu.core_type = #tpu.core_type<tc>, window_params = [{transform_indices = @transform_0, window_bounds = array<i64: 1, 16, 4>}, {pipeline_mode = #tpu.pipeline_mode<synchronous>, transform_indices = @transform_1, window_bounds = array<i64: 20, 32>}, {pipeline_mode = #tpu.pipeline_mode<synchronous>, transform_indices = @transform_2, window_bounds = array<i64: 1, 32>}, {transform_indices = @transform_3, window_bounds = array<i64: 1, 16, 32>}]} {
    %c0 = arith.constant 0 : index
    %c0_0 = arith.constant 0 : index
    %c0_1 = arith.constant 0 : index
    %0 = vector.load %arg1[%c0, %c0_0, %c0_1] : memref<1x16x4xf32, #tpu.memory_space<vmem>>, vector<1x16x4xf32>
    %cst = arith.constant 0.000000e+00 : f32
    %1 = vector.broadcast %cst : f32 to vector<1x2x4xf32>
    %c0_2 = arith.constant 0 : index
    %c0_3 = arith.constant 0 : index
    %c0_4 = arith.constant 0 : index
    %2 = vector.load %arg5[%c0_2, %c0_3, %c0_4] : memref<1x20x4xf32, #tpu.memory_space<vmem>>, vector<1x2x4xf32>
    tpu.vector_store %arg5[%c0_2, %c0_3, %c0_4], %1 {strides = array<i32>} : memref<1x20x4xf32, #tpu.memory_space<vmem>>, vector<1x2x4xf32>,
    %cst_5 = arith.constant 0.000000e+00 : f32
    %3 = vector.broadcast %cst_5 : f32 to vector<1x2x4xf32>
    %c0_6 = arith.constant 0 : index
    %c18 = arith.constant 18 : index
    %c0_7 = arith.constant 0 : index
    %4 = vector.load %arg5[%c0_6, %c18, %c0_7] : memref<1x20x4xf32, #tpu.memory_space<vmem>>, vector<1x2x4xf32>
    tpu.vector_store %arg5[%c0_6, %c18, %c0_7], %3 {strides = array<i32>} : memref<1x20x4xf32, #tpu.memory_space<vmem>>, vector<1x2x4xf32>,
    %c0_8 = arith.constant 0 : index
    %c2 = arith.constant 2 : index
    %c0_9 = arith.constant 0 : index
    %5 = vector.load %arg5[%c0_8, %c2, %c0_9] : memref<1x20x4xf32, #tpu.memory_space<vmem>>, vector<1x16x4xf32>
    tpu.vector_store %arg5[%c0_8, %c2, %c0_9], %0 {strides = array<i32>} : memref<1x20x4xf32, #tpu.memory_space<vmem>>, vector<1x16x4xf32>,
    %c0_10 = arith.constant 0 : index
    %c0_11 = arith.constant 0 : index
    %c0_12 = arith.constant 0 : index
    %6 = vector.load %arg5[%c0_10, %c0_11, %c0_12] : memref<1x20x4xf32, #tpu.memory_space<vmem>>, vector<1x16x4xf32>
    %c0_13 = arith.constant 0 : index
    %c1 = arith.constant 1 : index
    %c0_14 = arith.constant 0 : index
    %7 = vector.load %arg5[%c0_13, %c1, %c0_14] : memref<1x20x4xf32, #tpu.memory_space<vmem>>, vector<1x16x4xf32>
    %c0_15 = arith.constant 0 : index
    %c2_16 = arith.constant 2 : index
    %c0_17 = arith.constant 0 : index
    %8 = vector.load %arg5[%c0_15, %c2_16, %c0_17] : memref<1x20x4xf32, #tpu.memory_space<vmem>>, vector<1x16x4xf32>
    %c0_18 = arith.constant 0 : index
    %c3 = arith.constant 3 : index
    %c0_19 = arith.constant 0 : index
    %9 = vector.load %arg5[%c0_18, %c3, %c0_19] : memref<1x20x4xf32, #tpu.memory_space<vmem>>, vector<1x16x4xf32>
    %c0_20 = arith.constant 0 : index
    %c4 = arith.constant 4 : index
    %c0_21 = arith.constant 0 : index
    %10 = vector.load %arg5[%c0_20, %c4, %c0_21] : memref<1x20x4xf32, #tpu.memory_space<vmem>>, vector<1x16x4xf32>
    %11 = tpu.concatenate %6, %7, %8, %9, %10 in 2 : vector<1x16x4xf32>, vector<1x16x4xf32>, vector<1x16x4xf32>, vector<1x16x4xf32>, vector<1x16x4xf32> -> vector<1x16x20xf32>
    %12 = vector.shape_cast %11 : vector<1x16x20xf32> to vector<16x20xf32>
    %c0_22 = arith.constant 0 : index
    %c0_23 = arith.constant 0 : index
    %13 = vector.load %arg2[%c0_22, %c0_23] : memref<20x32xf32, #tpu.memory_space<vmem>>, vector<20x32xf32>
    %cst_24 = arith.constant dense<0.000000e+00> : vector<16x32xf32>
    %14 = tpu.matmul %12, %13, %cst_24 {dimension_numbers = #tpu.dot_dimension_numbers<[1], [0], [0], [1], [0, 0, 1, 1], [], []>} : vector<16x20xf32>, vector<20x32xf32>, vector<16x32xf32> -> vector<16x32xf32>
    %c0_25 = arith.constant 0 : index
    %c0_26 = arith.constant 0 : index
    %15 = vector.load %arg3[%c0_25, %c0_26] : memref<1x32xf32, #tpu.memory_space<vmem>>, vector<1x32xf32>
    %16 = vector.broadcast %15 : vector<1x32xf32> to vector<16x32xf32>
    %17 = arith.addf %14, %16 : vector<16x32xf32>
    %cst_27 = arith.constant 0.000000e+00 : f32
    %18 = vector.broadcast %cst_27 : f32 to vector<16x32xf32>
    %19 = arith.maximumf %17, %18 : vector<16x32xf32>
    %20 = vector.shape_cast %19 : vector<16x32xf32> to vector<1x16x32xf32>
    %c0_28 = arith.constant 0 : index
    %c0_29 = arith.constant 0 : index
    %c0_30 = arith.constant 0 : index
    %21 = vector.load %arg4[%c0_28, %c0_29, %c0_30] : memref<1x16x32xf32, #tpu.memory_space<vmem>>, vector<1x16x32xf32>
    tpu.vector_store %arg4[%c0_28, %c0_29, %c0_30], %20 {strides = array<i32>} : memref<1x16x32xf32, #tpu.memory_space<vmem>>, vector<1x16x32xf32>,
    return
  }
  func.func @transform_0(%arg0: i32) -> (i32, i32, i32) {
    %c0_i32 = arith.constant 0 : i32
    %c0_i32_0 = arith.constant 0 : i32
    %c0_i32_1 = arith.constant 0 : i32
    return %arg0, %c0_i32, %c0_i32_0 : i32, i32, i32
  }
  func.func @transform_1(%arg0: i32) -> (i32, i32) {
    %c0_i32 = arith.constant 0 : i32
    %c0_i32_0 = arith.constant 0 : i32
    %c0_i32_1 = arith.constant 0 : i32
    return %c0_i32, %c0_i32_0 : i32, i32
  }
  func.func @transform_2(%arg0: i32) -> (i32, i32) {
    %c0_i32 = arith.constant 0 : i32
    %c0_i32_0 = arith.constant 0 : i32
    %c0_i32_1 = arith.constant 0 : i32
    return %c0_i32, %c0_i32_0 : i32, i32
  }
  func.func @transform_3(%arg0: i32) -> (i32, i32, i32) {
    %c0_i32 = arith.constant 0 : i32
    %c0_i32_0 = arith.constant 0 : i32
    %c0_i32_1 = arith.constant 0 : i32
    return %arg0, %c0_i32, %c0_i32_0 : i32, i32, i32
  }
}

</mosaic_0001>

<llo_original>
// kernel: tpu_custom_call.1
$region0: #{tpu_custom_call.1}
  #allocation0 [shape = 'u32[]', space=smem, size = 0x4, offset = 0x4, fixed_abs, tag = 'smem constant byte address 0x4 - core index']
  #allocation1 [shape = 'u32[144,128]{1,0:T(1,128)}', space=vmem, size = 0x12000, scoped, tag = 'internal scratch']
  #allocation2 [shape = 'f32[1,20,4]{2,1,0:T(8,128)}', space=vmem, size = 0x3000, scoped, tag = 'scratch operand']
  %s0 = inlined_call_operand.hbm [shape: f32[2,4,16], index: 0, kind: input, shape index: {}]
  %s1 = inlined_call_operand.hbm [shape: f32[20,32], index: 1, kind: input, shape index: {}]
  %s2 = inlined_call_operand.vmem [shape: f32[1,32], index: 2, kind: input, shape index: {}]
  %s3 = inlined_call_operand.vmem [shape: f32[2,32,16], index: 3, kind: output, shape index: {}]
  %s4 = sld [smem:[#allocation0]]
  $region53: #{tpu_custom_call.1} parent=0
    _
  %s6 = ssub.s32 1, %s4
  %s7 = scalar_select 0, %s6, %s4
  $region1: #{tpu_custom_call.1} parent=0
    #allocation3 [shape = 'u8[4096]{0}', space=vmem, size = 0x1000, scoped, tag = 'input window, operand 0']
    #allocation4 [shape = 's32[2]{0}', space=sflag, size = 0x8, scoped, tag = 'scoped memory for tpu_custom_call.1']
    #allocation5 [shape = 'u8[12288]{0}', space=vmem, size = 0x3000, scoped, tag = 'input window, operand 1, single buffered']
    #allocation6 [shape = 's32[1]{0}', space=sflag, size = 0x4, scoped, tag = 'scoped memory for tpu_custom_call.1']
    %8 = vsyncpa [#allocation4], 0
    %s9 = scalar_lea.sflag [#allocation4], 1
    %10 = vsyncpa %s9, 0
    %11 = vsyncpa [#allocation6], 0
    loop: start=0, step=1, limit=4
    $region2: #{tpu_custom_call.1} parent=1 // loop_pre_header
      _
    $region3: #{tpu_custom_call.1} parent=1 // loop_header
      %s13 = sphi 0, %s17
      %p14 = scmp.ge.s32.totalorder %s13, 4
      %s23 = sphi 0, %s25
      %s26 = sphi 0, %s23
      %s27 = sphi 0, %s26
      %s43 = sphi 0, %s27
      %s47 = sphi 0, %s47
      %s49 = sphi 0, %s47
      %s50 = sphi 0, %s49
      %s64 = sphi 0, %s50
      %s68 = sphi 0, %s68
      %s70 = sphi 0, %s68
      %s71 = sphi 0, %s70
      %s85 = sphi 0, %s71
      %s91 = sphi 0, %s93
      %s94 = sphi 0, %s91
      %s95 = sphi 0, %s94
      %s111 = sphi 0, %s95
    $region4: #{tpu_custom_call.1} parent=1 // loop_header_branch
      %16 = sbr.rel (%p14) target = $region8
    $region5: #{tpu_custom_call.1} parent=1 // loop_body
      %s18 = ssub.s32 %s13, 1
      %s19 = ssub.s32 %s13, 2
      %s20 = sadd.s32 %s13, 1
      %s21 = ssub.s32 %s13, %s20
      %p22 = scmp.eq.s32.totalorder %s21, 0
      %s24 = sadd.s32 %s23, 1
      %s25 = scalar_select %p22, %s23, %s24
      %p28 = pneg %p22
      %p29 = scmp.eq.s32.totalorder %s13, 1
      %p30 = por %p28, %p29
      %p31 = scmp.ne.s32.totalorder %s23, %s26
      %p32 = scmp.eq.s32.totalorder %s13, 0
      %p33 = por %p31, %p32
      %p34 = scmp.ne.s32.totalorder %s23, %s26
      %p35 = scmp.eq.s32.totalorder %s18, 1
      %p36 = por %p34, %p35
      %p37 = scmp.ne.s32.totalorder %s26, %s27
      %p38 = scmp.eq.s32.totalorder %s18, 0
      %p39 = por %p37, %p38
      %p40 = scmp.ne.s32.totalorder %s26, %s27
      %p41 = scmp.eq.s32.totalorder %s19, 1
      %p42 = por %p40, %p41
      %p44 = scmp.ne.s32.totalorder %s27, %s43
      %p45 = scmp.eq.s32.totalorder %s19, 0
      %p46 = por %p44, %p45
      %s48 = sadd.s32 %s47, 1
      %p51 = scmp.eq.s32.totalorder %s13, 1
      %p52 = scmp.ne.s32.totalorder %s47, %s49
      %p53 = scmp.eq.s32.totalorder %s13, 0
      %p54 = por %p52, %p53
      %p55 = scmp.ne.s32.totalorder %s47, %s49
      %p56 = scmp.eq.s32.totalorder %s18, 1
      %p57 = por %p55, %p56
      %p58 = scmp.ne.s32.totalorder %s49, %s50
      %p59 = scmp.eq.s32.totalorder %s18, 0
      %p60 = por %p58, %p59
      %p61 = scmp.ne.s32.totalorder %s49, %s50
      %p62 = scmp.eq.s32.totalorder %s19, 1
      %p63 = por %p61, %p62
      %p65 = scmp.ne.s32.totalorder %s50, %s64
      %p66 = scmp.eq.s32.totalorder %s19, 0
      %p67 = por %p65, %p66
      %s69 = sadd.s32 %s68, 1
      %p72 = scmp.eq.s32.totalorder %s13, 1
      %p73 = scmp.ne.s32.totalorder %s68, %s70
      %p74 = scmp.eq.s32.totalorder %s13, 0
      %p75 = por %p73, %p74
      %p76 = scmp.ne.s32.totalorder %s68, %s70
      %p77 = scmp.eq.s32.totalorder %s18, 1
      %p78 = por %p76, %p77
      %p79 = scmp.ne.s32.totalorder %s70, %s71
      %p80 = scmp.eq.s32.totalorder %s18, 0
      %p81 = por %p79, %p80
      %p82 = scmp.ne.s32.totalorder %s70, %s71
      %p83 = scmp.eq.s32.totalorder %s19, 1
      %p84 = por %p82, %p83
      %p86 = scmp.ne.s32.totalorder %s71, %s85
      %p87 = scmp.eq.s32.totalorder %s19, 0
      %p88 = por %p86, %p87
      %s89 = ssub.s32 %s13, %s20
      %p90 = scmp.eq.s32.totalorder %s89, 0
      %s92 = sadd.s32 %s91, 1
      %s93 = scalar_select %p90, %s91, %s92
      %p96 = pneg %p90
      %p97 = scmp.eq.s32.totalorder %s13, 1
      %p98 = por %p96, %p97
      %p99 = scmp.ne.s32.totalorder %s91, %s94
      %p100 = scmp.eq.s32.totalorder %s13, 0
      %p101 = por %p99, %p100
      %p102 = scmp.ne.s32.totalorder %s91, %s94
      %p103 = scmp.eq.s32.totalorder %s18, 1
      %p104 = por %p102, %p103
      %p105 = scmp.ne.s32.totalorder %s94, %s95
      %p106 = scmp.eq.s32.totalorder %s18, 0
      %p107 = por %p105, %p106
      %p108 = scmp.ne.s32.totalorder %s94, %s95
      %p109 = scmp.eq.s32.totalorder %s19, 1
      %p110 = por %p108, %p109
      %p112 = scmp.ne.s32.totalorder %s95, %s111
      %p113 = scmp.eq.s32.totalorder %s19, 0
      %p114 = por %p112, %p113
      %p115 = scmp.le.s32.totalorder 1, %s13
      %p116 = scmp.lt.s32.totalorder %s13, 3
      %p117 = pnand %p115, %p116
      %p118 = pneg %p117
      // Predicated region
      $region9: #{tpu_custom_call.1} parent=5 // pred_check
        _
      $region10: #{tpu_custom_call.1} parent=5 // pred_check_branch
        %120 = sbr.rel (%p117) target = $region12
      $region11: #{tpu_custom_call.1} parent=5 // pred_region
        %s121 = ssub.s32 %s13, 1
        // Predicated region
        $region13: #{tpu_custom_call.1} parent=11 // pred_check
          %p122 = pneg %p60
        $region14: #{tpu_custom_call.1} parent=11 // pred_check_branch
          %124 = sbr.rel (%p122) target = $region16
        $region15: #{tpu_custom_call.1} parent=11 // pred_region
          %s126 = ssub.s32 384, 384
          %127 = vsyncadd [#allocation6], %s126
          %s128 = sshll.u32 [#allocation5], 4
          %s129 = int_to_ptr.vmem [resolvable:$true] %s128
          %134 = dma.hbm_to_vmem [thread:$0]  %s1, 384, %s129, [#allocation6], 128, 128, 8
        $region16: #{tpu_custom_call.1} parent=11 // pred_fallthru
          _
        // Predicated region
        $region17: #{tpu_custom_call.1} parent=11 // pred_check
          %p135 = pneg %p81
        $region18: #{tpu_custom_call.1} parent=11 // pred_check_branch
          %137 = sbr.rel (%p135) target = $region20
        $region19: #{tpu_custom_call.1} parent=11 // pred_region
          _
        $region20: #{tpu_custom_call.1} parent=11 // pred_fallthru
          _
      $region12: #{tpu_custom_call.1} parent=5 // pred_fallthru
        _
      %p138 = scmp.lt.s32.totalorder %s13, 2
      // Predicated region
      $region21: #{tpu_custom_call.1} parent=5 // pred_check
        %p139 = pneg %p138
      $region22: #{tpu_custom_call.1} parent=5 // pred_check_branch
        %141 = sbr.rel (%p139) target = $region24
      $region23: #{tpu_custom_call.1} parent=5 // pred_region
        // Predicated region
        $region25: #{tpu_custom_call.1} parent=23 // pred_check
          %p142 = pneg %p33
        $region26: #{tpu_custom_call.1} parent=23 // pred_check_branch
          %144 = sbr.rel (%p142) target = $region28
        $region27: #{tpu_custom_call.1} parent=23 // pred_region
          %s145 = sand.u32 %s23, 1
          %s146 = scalar_lea.sflag [#allocation4], %s145
          %s147 = sand.u32 %s23, 1
          %s148 = smul.addr %s147, 4
          %s149 = scalar_lea.vmem [#allocation3], %s148
          %s151 = ssub.s32 64, 64
          %152 = vsyncadd %s146, %s151
          %s153 = smul.addr %s13, 64
          %s154 = scalar_lea.hbm %s0, %s153
          %s156 = sshll.u32 %s149, 4
          %s157 = int_to_ptr.vmem [resolvable:$true] %s156
          %159 = dma.hbm_to_vmem [thread:$0]  %s154, 64, %s157, %s146
        $region28: #{tpu_custom_call.1} parent=23 // pred_fallthru
          _
      $region24: #{tpu_custom_call.1} parent=5 // pred_fallthru
        _
      %p160 = scmp.le.s32.totalorder 1, %s13
      %p161 = scmp.lt.s32.totalorder %s13, 3
      %p162 = pnand %p160, %p161
      %p163 = pneg %p162
      // Predicated region
      $region29: #{tpu_custom_call.1} parent=5 // pred_check
        _
      $region30: #{tpu_custom_call.1} parent=5 // pred_check_branch
        %165 = sbr.rel (%p162) target = $region32
      $region31: #{tpu_custom_call.1} parent=5 // pred_region
        %s166 = ssub.s32 %s13, 1
        %s167 = sand.u32 %s26, 1
        %s168 = scalar_lea.sflag [#allocation4], %s167
        %s169 = sand.u32 %s26, 1
        %s170 = smul.addr %s169, 4
        %s171 = scalar_lea.vmem [#allocation3], %s170
        // Predicated region
        $region33: #{tpu_custom_call.1} parent=31 // pred_check
          %p172 = pneg %p39
        $region34: #{tpu_custom_call.1} parent=31 // pred_check_branch
          %174 = sbr.rel (%p172) target = $region36
        $region35: #{tpu_custom_call.1} parent=31 // pred_region
          %175 = dma.done %s168, 64
        $region36: #{tpu_custom_call.1} parent=31 // pred_fallthru
          _
        // Predicated region
        $region37: #{tpu_custom_call.1} parent=31 // pred_check
          %p176 = pneg %p60
        $region38: #{tpu_custom_call.1} parent=31 // pred_check_branch
          %178 = sbr.rel (%p176) target = $region40
        $region39: #{tpu_custom_call.1} parent=31 // pred_region
          %179 = dma.done [#allocation6], 384
        $region40: #{tpu_custom_call.1} parent=31 // pred_fallthru
          _
        %s180 = sand.u32 %s26, 1
        %s181 = scalar_lea.sflag [#allocation4], %s180
        %s182 = sand.u32 %s26, 1
        %s183 = smul.addr %s182, 4
        %s184 = scalar_lea.vmem [#allocation3], %s183
        %p185 = pneg %p39
        %p186 = pneg %p36
        %p187 = pneg %p60
        %p188 = pneg %p57
        %p189 = pneg %p81
        %p190 = pneg %p78
        %p191 = pneg %p107
        %p192 = pneg %p104
        %p193 = scmp.lt.s32.totalorder %s18, 1
        %s194 = scalar_select %p193, %s18, 1
        %s195 = smul.addr %s194, 4
        %s196 = smul.addr %s195, 8
        %s197 = scalar_lea.vmem %s3, %s196
        %p198 = scmp.lt.s32.totalorder %s18, 1
        %s199 = scalar_select %p198, %s18, 1
        %s200 = smul.addr %s199, 4
        %s201 = smul.addr %s200, 8
        %s202 = scalar_lea.vmem %s3, %s201
        %v203 = vld [vmem:[%s171] sm:$0xf]
        %204 = vxpose.xlu0.b32.start [1/16] %v203, 128
        %205 = vxpose.xlu0.b32.cont [2/16] 0.0, 128
        %206 = vxpose.xlu0.b32.cont [3/16] 0.0, 128
        %207 = vxpose.xlu0.b32.cont [4/16] 0.0, 128
        %208 = vxpose.xlu0.b32.cont [5/16] 0.0, 128
        %209 = vxpose.xlu0.b32.cont [6/16] 0.0, 128
        %210 = vxpose.xlu0.b32.cont [7/16] 0.0, 128
        %211 = vxpose.xlu0.b32.cont [8/16] 0.0, 128
        %212 = vxpose.xlu0.b32.cont [9/16] 0.0, 128
        %213 = vxpose.xlu0.b32.cont [10/16] 0.0, 128
        %214 = vxpose.xlu0.b32.cont [11/16] 0.0, 128
        %215 = vxpose.xlu0.b32.cont [12/16] 0.0, 128
        %216 = vxpose.xlu0.b32.cont [13/16] 0.0, 128
        %217 = vxpose.xlu0.b32.cont [14/16] 0.0, 128
        %218 = vxpose.xlu0.b32.cont [15/16] 0.0, 128
        %219 = vxpose.xlu0.b32.end [16/16] 0.0, 128
        %v220 = vpop.trf.xlu0
        %v221 = vpop.trf.xlu0
        %v222 = vpop.trf.xlu0
        %v223 = vpop.trf.xlu0
        %v224 = vpop.trf.xlu0
        %v225 = vpop.trf.xlu0
        %v226 = vpop.trf.xlu0
        %v227 = vpop.trf.xlu0
        %v228 = vpop.trf.xlu0
        %v229 = vpop.trf.xlu0
        %v230 = vpop.trf.xlu0
        %v231 = vpop.trf.xlu0
        %v232 = vpop.trf.xlu0
        %v233 = vpop.trf.xlu0
        %v234 = vpop.trf.xlu0
        %v235 = vpop.trf.xlu0
        %vm236 = vcmask 25600
        %237 = vst.msk [vmem:[#allocation2] sm:$0x3] %vm236, 0.0
        %238 = vst.msk [vmem:[#allocation2 + $0x12] sm:$0x3] %vm236, 0.0
        %vm239 = vcmask 31744
        %240 = vst.msk [vmem:[#allocation2 + $0x2] sm:$0xff] %vm239, %v220
        %241 = vst.msk [vmem:[#allocation2 + $0xa] sm:$0xff] %vm239, %v221
        %v242 = vld [vmem:[#allocation2] sm:$0xff]
        %v243 = vld [vmem:[#allocation2 + $0x8] sm:$0xff]
        %v244 = vld [vmem:[#allocation2 + $0x1] sm:$0xff]
        %v245 = vld [vmem:[#allocation2 + $0x9] sm:$0xff]
        %v246 = vld [vmem:[#allocation2 + $0x2] sm:$0xff]
        %v247 = vld [vmem:[#allocation2 + $0xa] sm:$0xff]
        %v248 = vld [vmem:[#allocation2 + $0x3] sm:$0xff]
        %v249 = vld [vmem:[#allocation2 + $0xb] sm:$0xff]
        %v250 = vld [vmem:[#allocation2 + $0x4] sm:$0xff]
        %v251 = vld [vmem:[#allocation2 + $0xc] sm:$0xff]
        %254 = vrot.lane.b32.xlu0 %v244, 4
        %v255 = vpop.permute.xlu0 %254
        %256 = vrot.lane.b32.xlu0 %v245, 4
        %v257 = vpop.permute.xlu0 %256
        %262 = vrot.lane.b32.xlu0 %v246, 8
        %v263 = vpop.permute.xlu0 %262
        %264 = vrot.lane.b32.xlu0 %v247, 8
        %v265 = vpop.permute.xlu0 %264
        %270 = vrot.lane.b32.xlu0 %v248, 12
        %v271 = vpop.permute.xlu0 %270
        %272 = vrot.lane.b32.xlu0 %v249, 12
        %v273 = vpop.permute.xlu0 %272
        %278 = vrot.lane.b32.xlu0 %v250, 16
        %v279 = vpop.permute.xlu0 %278
        %280 = vrot.lane.b32.xlu0 %v251, 16
        %v281 = vpop.permute.xlu0 %280
        %v284 = vsel %vm239, %v242, %v255
        %v285 = vsel %vm239, %v243, %v257
        %vm286 = vcmask 64512
        %v287 = vsel %vm286, %v284, %v263
        %v288 = vsel %vm286, %v285, %v265
        %vm289 = vcmask 97280
        %v290 = vsel %vm289, %v287, %v271
        %v291 = vsel %vm289, %v288, %v273
        %vm292 = vcmask 130048
        %v293 = vsel %vm292, %v290, %v279
        %v294 = vsel %vm292, %v291, %v281
        %v295 = vld [vmem:[#allocation5] sm:$0xff]
        %v296 = vld [vmem:[#allocation5 + $0x8] sm:$0xff]
        %v297 = vld [vmem:[#allocation5 + $0x10] sm:$0xf]
        %v298 = vld [vmem:[%s2] sm:$0x1]
        %v300 = vlaneseq
        %v301 = vshrl.u32 %v300, 7
        %v302 = vsub.s32 0, %v301
        %v303 = vrot.slane %v298, %v302
        %vm305 = vcmask 162816
        %v307 = vsel %vm305, %v293, 0
        %v310 = vsel %vm305, %v294, 0
        %vm312 = vcmask 1043456
        %v314 = vsel %vm312, %v297, 0
        %316 = vmatprep.subr.mxu0 0.0
        %317 = vmatpush1.msra.mxu0 %v295
        %318 = vmatprep.subr.mxu0 0.0
        %319 = vmatpush1.msra.mxu0 %v296
        %320 = vmatprep.subr.mxu0 0.0
        %321 = vmatpush1.msra.mxu0 %v314
        %322 = vmatprep.subr.mxu0 0.0
        %323 = vmatpush1.msra.mxu0 0.0
        %324 = vmatprep.subr.mxu0 0.0
        %325 = vmatpush1.msra.mxu0 0.0
        %326 = vmatprep.subr.mxu0 0.0
        %327 = vmatpush1.msra.mxu0 0.0
        %328 = vmatprep.subr.mxu0 0.0
        %329 = vmatpush1.msra.mxu0 0.0
        %330 = vmatprep.subr.mxu0 0.0
        %331 = vmatpush1.msra.mxu0 0.0
        %332 = vmatprep.subr.mxu0 0.0
        %333 = vmatpush1.msra.mxu0 0.0
        %334 = vmatprep.subr.mxu0 0.0
        %335 = vmatpush1.msra.mxu0 0.0
        %336 = vmatprep.subr.mxu0 0.0
        %337 = vmatpush1.msra.mxu0 0.0
        %338 = vmatprep.subr.mxu0 0.0
        %339 = vmatpush1.msra.mxu0 0.0
        %340 = vmatprep.subr.mxu0 0.0
        %341 = vmatpush1.msra.mxu0 0.0
        %342 = vmatprep.subr.mxu0 0.0
        %343 = vmatpush1.msra.mxu0 0.0
        %344 = vmatprep.subr.mxu0 0.0
        %345 = vmatpush1.msra.mxu0 0.0
        %346 = vmatprep.subr.mxu0 0.0
        %347 = vmatpush1.msra.mxu0 0.0
        %348 = vmatprep.subr.mxu0 0.0
        %349 = vmatpush1.msra.mxu0 0.0
        %350 = vmatprep.subr.mxu0 0.0
        %351 = vmatpush1.msra.mxu0 0.0
        %352 = vmatprep.subr.mxu0 0.0
        %353 = vmatpush1.msra.mxu0 0.0
        %354 = vmatprep.subr.mxu0 0.0
        %355 = vmatpush1.msra.mxu0 0.0
        %356 = vmatprep.subr.mxu0 0.0
        %357 = vmatpush1.msra.mxu0 0.0
        %358 = vmatprep.subr.mxu0 0.0
        %359 = vmatpush1.msra.mxu0 0.0
        %360 = vmatprep.subr.mxu0 0.0
        %361 = vmatpush1.msra.mxu0 0.0
        %362 = vmatprep.subr.mxu0 0.0
        %363 = vmatpush1.msra.mxu0 0.0
        %364 = vmatprep.subr.mxu0 0.0
        %365 = vmatpush1.msra.mxu0 0.0
        %366 = vmatprep.subr.mxu0 0.0
        %367 = vmatpush1.msra.mxu0 0.0
        %368 = vmatprep.subr.mxu0 0.0
        %369 = vmatpush1.msra.mxu0 0.0
        %370 = vmatprep.subr.mxu0 0.0
        %371 = vmatpush1.msra.mxu0 0.0
        %372 = vmatprep.subr.mxu0 0.0
        %373 = vmatpush1.msra.mxu0 0.0
        %374 = vmatprep.subr.mxu0 0.0
        %375 = vmatpush1.msra.mxu0 0.0
        %376 = vmatprep.subr.mxu0 0.0
        %377 = vmatpush1.msra.mxu0 0.0
        %378 = vmatprep.subr.mxu0 0.0
        %379 = vmatpush1.msra.mxu0 0.0
        %380 = vmatprep.mubr.f32.mxu0 0.0
        %381 = vmatmul.mubr.f32.gmra.mrb[0].mxu0 %v307
        %v382 = vpop.f32.mrb[0].mxu0
        %v383 = vadd.f32 %v303, %v382
        %v384 = vpop.f32.mrb[0].mxu0
        %385 = vmatprep.mubr.f32.mxu0 0.0
        %386 = vmatmul.mubr.f32.gmra.mrb[0].mxu0 %v310
        %v387 = vpop.f32.mrb[0].mxu0
        %v388 = vadd.f32 %v303, %v387
        %v389 = vpop.f32.mrb[0].mxu0
        %390 = vdwg.mxu0
        %v391 = vmax.f32 %v383, 0.0
        %v392 = vmax.f32 %v388, 0.0
        %393 = vxpose.xlu0.b32.start [1/16] %v391, 128
        %394 = vxpose.xlu0.b32.cont [2/16] %v392, 128
        %395 = vxpose.xlu0.b32.cont [3/16] 0.0, 128
        %396 = vxpose.xlu0.b32.cont [4/16] 0.0, 128
        %397 = vxpose.xlu0.b32.cont [5/16] 0.0, 128
        %398 = vxpose.xlu0.b32.cont [6/16] 0.0, 128
        %399 = vxpose.xlu0.b32.cont [7/16] 0.0, 128
        %400 = vxpose.xlu0.b32.cont [8/16] 0.0, 128
        %401 = vxpose.xlu0.b32.cont [9/16] 0.0, 128
        %402 = vxpose.xlu0.b32.cont [10/16] 0.0, 128
        %403 = vxpose.xlu0.b32.cont [11/16] 0.0, 128
        %404 = vxpose.xlu0.b32.cont [12/16] 0.0, 128
        %405 = vxpose.xlu0.b32.cont [13/16] 0.0, 128
        %406 = vxpose.xlu0.b32.cont [14/16] 0.0, 128
        %407 = vxpose.xlu0.b32.cont [15/16] 0.0, 128
        %408 = vxpose.xlu0.b32.end [16/16] 0.0, 128
        %v409 = vpop.trf.xlu0
        %v410 = vpop.trf.xlu0
        %v411 = vpop.trf.xlu0
        %v412 = vpop.trf.xlu0
        %v413 = vpop.trf.xlu0
        %v414 = vpop.trf.xlu0
        %v415 = vpop.trf.xlu0
        %v416 = vpop.trf.xlu0
        %v417 = vpop.trf.xlu0
        %v418 = vpop.trf.xlu0
        %v419 = vpop.trf.xlu0
        %v420 = vpop.trf.xlu0
        %v421 = vpop.trf.xlu0
        %v422 = vpop.trf.xlu0
        %v423 = vpop.trf.xlu0
        %v424 = vpop.trf.xlu0
        %425 = vst.msk [vmem:[%s202] sm:$0xff] %vm292, %v409
        %426 = vst.msk [vmem:[%s202 + $0x8] sm:$0xff] %vm292, %v410
        %427 = vst.msk [vmem:[%s202 + $0x10] sm:$0xff] %vm292, %v411
        %428 = vst.msk [vmem:[%s202 + $0x18] sm:$0xff] %vm292, %v412
        %p429 = scmp.lt.s32.totalorder %s18, 1
        %s430 = scalar_select %p429, %s18, 1
        %s431 = smul.addr %s430, 4
        %s432 = smul.addr %s431, 8
        %s433 = scalar_lea.vmem %s3, %s432
        // Predicated region
        $region41: #{tpu_custom_call.1} parent=31 // pred_check
          %p434 = pneg %p104
        $region42: #{tpu_custom_call.1} parent=31 // pred_check_branch
          %436 = sbr.rel (%p434) target = $region44
        $region43: #{tpu_custom_call.1} parent=31 // pred_region
          _
        $region44: #{tpu_custom_call.1} parent=31 // pred_fallthru
          _
      $region32: #{tpu_custom_call.1} parent=5 // pred_fallthru
        _
      %p437 = scmp.le.s32.totalorder 2, %s13
      // Predicated region
      $region45: #{tpu_custom_call.1} parent=5 // pred_check
        %p438 = pneg %p437
      $region46: #{tpu_custom_call.1} parent=5 // pred_check_branch
        %440 = sbr.rel (%p438) target = $region48
      $region47: #{tpu_custom_call.1} parent=5 // pred_region
        %s441 = ssub.s32 %s13, 2
        // Predicated region
        $region49: #{tpu_custom_call.1} parent=47 // pred_check
          %p442 = pneg %p110
        $region50: #{tpu_custom_call.1} parent=47 // pred_check_branch
          %444 = sbr.rel (%p442) target = $region52
        $region51: #{tpu_custom_call.1} parent=47 // pred_region
          %p445 = scmp.lt.s32.totalorder %s19, 1
          %s446 = scalar_select %p445, %s19, 1
          %s447 = smul.addr %s446, 4
          %s448 = smul.addr %s447, 8
          %s449 = scalar_lea.vmem %s3, %s448
        $region52: #{tpu_custom_call.1} parent=47 // pred_fallthru
          _
      $region48: #{tpu_custom_call.1} parent=5 // pred_fallthru
        _
    $region6: #{tpu_custom_call.1} parent=1 // loop_footer
      %s17 = sadd.s32 1, %s13
    $region7: #{tpu_custom_call.1} parent=1 // loop_footer_branch
      %12 = sbr.rel target = $region3
    $region8: #{tpu_custom_call.1} parent=1 // loop_exit
      _
    %450 = vsyncpa [#allocation4], 1
    %s451 = scalar_lea.sflag [#allocation4], 1
    %452 = vsyncpa %s451, 1
    %453 = vsyncpa [#allocation6], 1

// kernel: tpu_custom_call.1
$region0: #{tpu_custom_call.1}
  #allocation0 [shape = 'u32[]', space=smem, size = 0x4, offset = 0x4, fixed_abs, tag = 'smem constant byte address 0x4 - core index']
  #allocation1 [shape = 'u32[144,128]{1,0:T(1,128)}', space=vmem, size = 0x12000, scoped, tag = 'internal scratch']
  #allocation2 [shape = 'f32[1,20,4]{2,1,0:T(8,128)}', space=vmem, size = 0x3000, scoped, tag = 'scratch operand']
  %s0 = inlined_call_operand.vmem [shape: f32[2,16,4], index: 0, kind: input, shape index: {}]
  %s1 = inlined_call_operand.vmem [shape: f32[20,32], index: 1, kind: input, shape index: {}]
  %s2 = inlined_call_operand.vmem [shape: f32[1,32], index: 2, kind: input, shape index: {}]
  %s3 = inlined_call_operand.hbm [shape: f32[2,16,32], index: 3, kind: output, shape index: {}]
  %s4 = sld [smem:[#allocation0]]
  $region45: #{tpu_custom_call.1} parent=0
    _
  %s6 = ssub.s32 1, %s4
  %s7 = scalar_select 0, %s6, %s4
  $region1: #{tpu_custom_call.1} parent=0
    #allocation3 [shape = 'u8[16384]{0}', space=vmem, size = 0x4000, scoped, tag = 'output window, operand 0']
    #allocation4 [shape = 's32[2]{0}', space=sflag, size = 0x8, scoped, tag = 'scoped memory for tpu_custom_call.1']
    %8 = vsyncpa [#allocation4], 0
    %s9 = scalar_lea.sflag [#allocation4], 1
    %10 = vsyncpa %s9, 0
    loop: start=0, step=1, limit=4
    $region2: #{tpu_custom_call.1} parent=1 // loop_pre_header
      _
    $region3: #{tpu_custom_call.1} parent=1 // loop_header
      %s12 = sphi 0, %s16
      %p13 = scmp.ge.s32.totalorder %s12, 4
      %s22 = sphi 0, %s24
      %s25 = sphi 0, %s22
      %s26 = sphi 0, %s25
      %s42 = sphi 0, %s26
      %s46 = sphi 0, %s46
      %s48 = sphi 0, %s46
      %s49 = sphi 0, %s48
      %s63 = sphi 0, %s49
      %s67 = sphi 0, %s67
      %s69 = sphi 0, %s67
      %s70 = sphi 0, %s69
      %s84 = sphi 0, %s70
      %s90 = sphi 0, %s92
      %s93 = sphi 0, %s90
      %s94 = sphi 0, %s93
      %s110 = sphi 0, %s94
    $region4: #{tpu_custom_call.1} parent=1 // loop_header_branch
      %15 = sbr.rel (%p13) target = $region8
    $region5: #{tpu_custom_call.1} parent=1 // loop_body
      %s17 = ssub.s32 %s12, 1
      %s18 = ssub.s32 %s12, 2
      %s19 = sadd.s32 %s12, 1
      %s20 = ssub.s32 %s12, %s19
      %p21 = scmp.eq.s32.totalorder %s20, 0
      %s23 = sadd.s32 %s22, 1
      %s24 = scalar_select %p21, %s22, %s23
      %p27 = pneg %p21
      %p28 = scmp.eq.s32.totalorder %s12, 1
      %p29 = por %p27, %p28
      %p30 = scmp.ne.s32.totalorder %s22, %s25
      %p31 = scmp.eq.s32.totalorder %s12, 0
      %p32 = por %p30, %p31
      %p33 = scmp.ne.s32.totalorder %s22, %s25
      %p34 = scmp.eq.s32.totalorder %s17, 1
      %p35 = por %p33, %p34
      %p36 = scmp.ne.s32.totalorder %s25, %s26
      %p37 = scmp.eq.s32.totalorder %s17, 0
      %p38 = por %p36, %p37
      %p39 = scmp.ne.s32.totalorder %s25, %s26
      %p40 = scmp.eq.s32.totalorder %s18, 1
      %p41 = por %p39, %p40
      %p43 = scmp.ne.s32.totalorder %s26, %s42
      %p44 = scmp.eq.s32.totalorder %s18, 0
      %p45 = por %p43, %p44
      %s47 = sadd.s32 %s46, 1
      %p50 = scmp.eq.s32.totalorder %s12, 1
      %p51 = scmp.ne.s32.totalorder %s46, %s48
      %p52 = scmp.eq.s32.totalorder %s12, 0
      %p53 = por %p51, %p52
      %p54 = scmp.ne.s32.totalorder %s46, %s48
      %p55 = scmp.eq.s32.totalorder %s17, 1
      %p56 = por %p54, %p55
      %p57 = scmp.ne.s32.totalorder %s48, %s49
      %p58 = scmp.eq.s32.totalorder %s17, 0
      %p59 = por %p57, %p58
      %p60 = scmp.ne.s32.totalorder %s48, %s49
      %p61 = scmp.eq.s32.totalorder %s18, 1
      %p62 = por %p60, %p61
      %p64 = scmp.ne.s32.totalorder %s49, %s63
      %p65 = scmp.eq.s32.totalorder %s18, 0
      %p66 = por %p64, %p65
      %s68 = sadd.s32 %s67, 1
      %p71 = scmp.eq.s32.totalorder %s12, 1
      %p72 = scmp.ne.s32.totalorder %s67, %s69
      %p73 = scmp.eq.s32.totalorder %s12, 0
      %p74 = por %p72, %p73
      %p75 = scmp.ne.s32.totalorder %s67, %s69
      %p76 = scmp.eq.s32.totalorder %s17, 1
      %p77 = por %p75, %p76
      %p78 = scmp.ne.s32.totalorder %s69, %s70
      %p79 = scmp.eq.s32.totalorder %s17, 0
      %p80 = por %p78, %p79
      %p81 = scmp.ne.s32.totalorder %s69, %s70
      %p82 = scmp.eq.s32.totalorder %s18, 1
      %p83 = por %p81, %p82
      %p85 = scmp.ne.s32.totalorder %s70, %s84
      %p86 = scmp.eq.s32.totalorder %s18, 0
      %p87 = por %p85, %p86
      %s88 = ssub.s32 %s12, %s19
      %p89 = scmp.eq.s32.totalorder %s88, 0
      %s91 = sadd.s32 %s90, 1
      %s92 = scalar_select %p89, %s90, %s91
      %p95 = pneg %p89
      %p96 = scmp.eq.s32.totalorder %s12, 1
      %p97 = por %p95, %p96
      %p98 = scmp.ne.s32.totalorder %s90, %s93
      %p99 = scmp.eq.s32.totalorder %s12, 0
      %p100 = por %p98, %p99
      %p101 = scmp.ne.s32.totalorder %s90, %s93
      %p102 = scmp.eq.s32.totalorder %s17, 1
      %p103 = por %p101, %p102
      %p104 = scmp.ne.s32.totalorder %s93, %s94
      %p105 = scmp.eq.s32.totalorder %s17, 0
      %p106 = por %p104, %p105
      %p107 = scmp.ne.s32.totalorder %s93, %s94
      %p108 = scmp.eq.s32.totalorder %s18, 1
      %p109 = por %p107, %p108
      %p111 = scmp.ne.s32.totalorder %s94, %s110
      %p112 = scmp.eq.s32.totalorder %s18, 0
      %p113 = por %p111, %p112
      %p114 = scmp.le.s32.totalorder 1, %s12
      %p115 = scmp.lt.s32.totalorder %s12, 3
      %p116 = pnand %p114, %p115
      %p117 = pneg %p116
      // Predicated region
      $region9: #{tpu_custom_call.1} parent=5 // pred_check
        _
      $region10: #{tpu_custom_call.1} parent=5 // pred_check_branch
        %119 = sbr.rel (%p116) target = $region12
      $region11: #{tpu_custom_call.1} parent=5 // pred_region
        %s120 = ssub.s32 %s12, 1
        // Predicated region
        $region13: #{tpu_custom_call.1} parent=11 // pred_check
          %p121 = pneg %p59
        $region14: #{tpu_custom_call.1} parent=11 // pred_check_branch
          %123 = sbr.rel (%p121) target = $region16
        $region15: #{tpu_custom_call.1} parent=11 // pred_region
          _
        $region16: #{tpu_custom_call.1} parent=11 // pred_fallthru
          _
        // Predicated region
        $region17: #{tpu_custom_call.1} parent=11 // pred_check
          %p124 = pneg %p80
        $region18: #{tpu_custom_call.1} parent=11 // pred_check_branch
          %126 = sbr.rel (%p124) target = $region20
        $region19: #{tpu_custom_call.1} parent=11 // pred_region
          _
        $region20: #{tpu_custom_call.1} parent=11 // pred_fallthru
          _
      $region12: #{tpu_custom_call.1} parent=5 // pred_fallthru
        _
      %p127 = scmp.lt.s32.totalorder %s12, 2
      // Predicated region
      $region21: #{tpu_custom_call.1} parent=5 // pred_check
        %p128 = pneg %p127
      $region22: #{tpu_custom_call.1} parent=5 // pred_check_branch
        %130 = sbr.rel (%p128) target = $region24
      $region23: #{tpu_custom_call.1} parent=5 // pred_region
        // Predicated region
        $region25: #{tpu_custom_call.1} parent=23 // pred_check
          %p131 = pneg %p32
        $region26: #{tpu_custom_call.1} parent=23 // pred_check_branch
          %133 = sbr.rel (%p131) target = $region28
        $region27: #{tpu_custom_call.1} parent=23 // pred_region
          %p134 = scmp.lt.s32.totalorder %s12, 1
          %s135 = scalar_select %p134, %s12, 1
          %s136 = smul.addr %s135, 2
          %s137 = smul.addr %s136, 8
          %s138 = scalar_lea.vmem %s0, %s137
        $region28: #{tpu_custom_call.1} parent=23 // pred_fallthru
          _
      $region24: #{tpu_custom_call.1} parent=5 // pred_fallthru
        _
      %p139 = scmp.le.s32.totalorder 1, %s12
      %p140 = scmp.lt.s32.totalorder %s12, 3
      %p141 = pnand %p139, %p140
      %p142 = pneg %p141
      // Predicated region
      $region29: #{tpu_custom_call.1} parent=5 // pred_check
        _
      $region30: #{tpu_custom_call.1} parent=5 // pred_check_branch
        %144 = sbr.rel (%p141) target = $region32
      $region31: #{tpu_custom_call.1} parent=5 // pred_region
        %s145 = ssub.s32 %s12, 1
        %p146 = scmp.lt.s32.totalorder %s17, 1
        %s147 = scalar_select %p146, %s17, 1
        %s148 = smul.addr %s147, 2
        %s149 = smul.addr %s148, 8
        %s150 = scalar_lea.vmem %s0, %s149
        %p151 = pneg %p38
        %p152 = pneg %p35
        %p153 = pneg %p59
        %p154 = pneg %p56
        %p155 = pneg %p80
        %p156 = pneg %p77
        %p157 = pneg %p106
        %p158 = pneg %p103
        %s159 = sand.u32 %s93, 1
        %s160 = scalar_lea.sflag [#allocation4], %s159
        %s161 = sand.u32 %s93, 1
        %s162 = smul.addr %s161, 16
        %s163 = scalar_lea.vmem [#allocation3], %s162
        %p164 = scmp.lt.s32.totalorder %s17, 1
        %s165 = scalar_select %p164, %s17, 1
        %s166 = smul.addr %s165, 2
        %s167 = smul.addr %s166, 8
        %s168 = scalar_lea.vmem %s0, %s167
        %v169 = vld [vmem:[%s168] sm:$0xff]
        %v170 = vld [vmem:[%s168 + $0x8] sm:$0xff]
        %vm171 = vcmask 25600
        %172 = vst.msk [vmem:[#allocation2] sm:$0x3] %vm171, 0.0
        %173 = vst.msk [vmem:[#allocation2 + $0x12] sm:$0x3] %vm171, 0.0
        %vm174 = vcmask 31744
        %175 = vst.msk [vmem:[#allocation2 + $0x2] sm:$0xff] %vm174, %v169
        %176 = vst.msk [vmem:[#allocation2 + $0xa] sm:$0xff] %vm174, %v170
        %v177 = vld [vmem:[#allocation2] sm:$0xff]
        %v178 = vld [vmem:[#allocation2 + $0x8] sm:$0xff]
        %v179 = vld [vmem:[#allocation2 + $0x1] sm:$0xff]
        %v180 = vld [vmem:[#allocation2 + $0x9] sm:$0xff]
        %v181 = vld [vmem:[#allocation2 + $0x2] sm:$0xff]
        %v182 = vld [vmem:[#allocation2 + $0xa] sm:$0xff]
        %v183 = vld [vmem:[#allocation2 + $0x3] sm:$0xff]
        %v184 = vld [vmem:[#allocation2 + $0xb] sm:$0xff]
        %v185 = vld [vmem:[#allocation2 + $0x4] sm:$0xff]
        %v186 = vld [vmem:[#allocation2 + $0xc] sm:$0xff]
        %189 = vrot.lane.b32.xlu0 %v179, 4
        %v190 = vpop.permute.xlu0 %189
        %191 = vrot.lane.b32.xlu0 %v180, 4
        %v192 = vpop.permute.xlu0 %191
        %197 = vrot.lane.b32.xlu0 %v181, 8
        %v198 = vpop.permute.xlu0 %197
        %199 = vrot.lane.b32.xlu0 %v182, 8
        %v200 = vpop.permute.xlu0 %199
        %205 = vrot.lane.b32.xlu0 %v183, 12
        %v206 = vpop.permute.xlu0 %205
        %207 = vrot.lane.b32.xlu0 %v184, 12
        %v208 = vpop.permute.xlu0 %207
        %213 = vrot.lane.b32.xlu0 %v185, 16
        %v214 = vpop.permute.xlu0 %213
        %215 = vrot.lane.b32.xlu0 %v186, 16
        %v216 = vpop.permute.xlu0 %215
        %v219 = vsel %vm174, %v177, %v190
        %v220 = vsel %vm174, %v178, %v192
        %vm221 = vcmask 64512
        %v222 = vsel %vm221, %v219, %v198
        %v223 = vsel %vm221, %v220, %v200
        %vm224 = vcmask 97280
        %v225 = vsel %vm224, %v222, %v206
        %v226 = vsel %vm224, %v223, %v208
        %vm227 = vcmask 130048
        %v228 = vsel %vm227, %v225, %v214
        %v229 = vsel %vm227, %v226, %v216
        %v230 = vld [vmem:[%s1] sm:$0xff]
        %v231 = vld [vmem:[%s1 + $0x8] sm:$0xff]
        %v232 = vld [vmem:[%s1 + $0x10] sm:$0xf]
        %v233 = vld [vmem:[%s2] sm:$0x1]
        %v235 = vlaneseq
        %v236 = vshrl.u32 %v235, 7
        %v237 = vsub.s32 0, %v236
        %v238 = vrot.slane %v233, %v237
        %vm240 = vcmask 162816
        %v242 = vsel %vm240, %v228, 0
        %v245 = vsel %vm240, %v229, 0
        %vm247 = vcmask 1043456
        %v249 = vsel %vm247, %v232, 0
        %251 = vmatprep.subr.mxu0 0.0
        %252 = vmatpush1.msra.mxu0 %v230
        %253 = vmatprep.subr.mxu0 0.0
        %254 = vmatpush1.msra.mxu0 %v231
        %255 = vmatprep.subr.mxu0 0.0
        %256 = vmatpush1.msra.mxu0 %v249
        %257 = vmatprep.subr.mxu0 0.0
        %258 = vmatpush1.msra.mxu0 0.0
        %259 = vmatprep.subr.mxu0 0.0
        %260 = vmatpush1.msra.mxu0 0.0
        %261 = vmatprep.subr.mxu0 0.0
        %262 = vmatpush1.msra.mxu0 0.0
        %263 = vmatprep.subr.mxu0 0.0
        %264 = vmatpush1.msra.mxu0 0.0
        %265 = vmatprep.subr.mxu0 0.0
        %266 = vmatpush1.msra.mxu0 0.0
        %267 = vmatprep.subr.mxu0 0.0
        %268 = vmatpush1.msra.mxu0 0.0
        %269 = vmatprep.subr.mxu0 0.0
        %270 = vmatpush1.msra.mxu0 0.0
        %271 = vmatprep.subr.mxu0 0.0
        %272 = vmatpush1.msra.mxu0 0.0
        %273 = vmatprep.subr.mxu0 0.0
        %274 = vmatpush1.msra.mxu0 0.0
        %275 = vmatprep.subr.mxu0 0.0
        %276 = vmatpush1.msra.mxu0 0.0
        %277 = vmatprep.subr.mxu0 0.0
        %278 = vmatpush1.msra.mxu0 0.0
        %279 = vmatprep.subr.mxu0 0.0
        %280 = vmatpush1.msra.mxu0 0.0
        %281 = vmatprep.subr.mxu0 0.0
        %282 = vmatpush1.msra.mxu0 0.0
        %283 = vmatprep.subr.mxu0 0.0
        %284 = vmatpush1.msra.mxu0 0.0
        %285 = vmatprep.subr.mxu0 0.0
        %286 = vmatpush1.msra.mxu0 0.0
        %287 = vmatprep.subr.mxu0 0.0
        %288 = vmatpush1.msra.mxu0 0.0
        %289 = vmatprep.subr.mxu0 0.0
        %290 = vmatpush1.msra.mxu0 0.0
        %291 = vmatprep.subr.mxu0 0.0
        %292 = vmatpush1.msra.mxu0 0.0
        %293 = vmatprep.subr.mxu0 0.0
        %294 = vmatpush1.msra.mxu0 0.0
        %295 = vmatprep.subr.mxu0 0.0
        %296 = vmatpush1.msra.mxu0 0.0
        %297 = vmatprep.subr.mxu0 0.0
        %298 = vmatpush1.msra.mxu0 0.0
        %299 = vmatprep.subr.mxu0 0.0
        %300 = vmatpush1.msra.mxu0 0.0
        %301 = vmatprep.subr.mxu0 0.0
        %302 = vmatpush1.msra.mxu0 0.0
        %303 = vmatprep.subr.mxu0 0.0
        %304 = vmatpush1.msra.mxu0 0.0
        %305 = vmatprep.subr.mxu0 0.0
        %306 = vmatpush1.msra.mxu0 0.0
        %307 = vmatprep.subr.mxu0 0.0
        %308 = vmatpush1.msra.mxu0 0.0
        %309 = vmatprep.subr.mxu0 0.0
        %310 = vmatpush1.msra.mxu0 0.0
        %311 = vmatprep.subr.mxu0 0.0
        %312 = vmatpush1.msra.mxu0 0.0
        %313 = vmatprep.subr.mxu0 0.0
        %314 = vmatpush1.msra.mxu0 0.0
        %315 = vmatprep.mubr.f32.mxu0 0.0
        %316 = vmatmul.mubr.f32.gmra.mrb[0].mxu0 %v242
        %v317 = vpop.f32.mrb[0].mxu0
        %v318 = vadd.f32 %v238, %v317
        %v319 = vpop.f32.mrb[0].mxu0
        %320 = vmatprep.mubr.f32.mxu0 0.0
        %321 = vmatmul.mubr.f32.gmra.mrb[0].mxu0 %v245
        %v322 = vpop.f32.mrb[0].mxu0
        %v323 = vadd.f32 %v238, %v322
        %v324 = vpop.f32.mrb[0].mxu0
        %325 = vdwg.mxu0
        %v326 = vmax.f32 %v318, 0.0
        %v327 = vmax.f32 %v323, 0.0
        %vm328 = vcmask 261120
        %329 = vst.msk [vmem:[%s163] sm:$0xff] %vm328, %v326
        %330 = vst.msk [vmem:[%s163 + $0x8] sm:$0xff] %vm328, %v327
        %s331 = sand.u32 %s93, 1
        %s332 = scalar_lea.sflag [#allocation4], %s331
        %s333 = sand.u32 %s93, 1
        %s334 = smul.addr %s333, 16
        %s335 = scalar_lea.vmem [#allocation3], %s334
        // Predicated region
        $region33: #{tpu_custom_call.1} parent=31 // pred_check
          %p336 = pneg %p103
        $region34: #{tpu_custom_call.1} parent=31 // pred_check_branch
          %338 = sbr.rel (%p336) target = $region36
        $region35: #{tpu_custom_call.1} parent=31 // pred_region
          %s340 = ssub.s32 256, 256
          %341 = vsyncadd %s332, %s340
          %s342 = smul.addr %s17, 2
          %s343 = smul.addr %s342, 128
          %s344 = scalar_lea.hbm %s3, %s343
          %s345 = sshll.u32 %s335, 4
          %s346 = int_to_ptr.vmem [resolvable:$true] %s345
          %351 = dma.vmem_to_hbm [thread:$0]  %s346, 256, %s344, %s332, 128, 128, 8
        $region36: #{tpu_custom_call.1} parent=31 // pred_fallthru
          _
      $region32: #{tpu_custom_call.1} parent=5 // pred_fallthru
        _
      %p352 = scmp.le.s32.totalorder 2, %s12
      // Predicated region
      $region37: #{tpu_custom_call.1} parent=5 // pred_check
        %p353 = pneg %p352
      $region38: #{tpu_custom_call.1} parent=5 // pred_check_branch
        %355 = sbr.rel (%p353) target = $region40
      $region39: #{tpu_custom_call.1} parent=5 // pred_region
        %s356 = ssub.s32 %s12, 2
        // Predicated region
        $region41: #{tpu_custom_call.1} parent=39 // pred_check
          %p357 = pneg %p109
        $region42: #{tpu_custom_call.1} parent=39 // pred_check_branch
          %359 = sbr.rel (%p357) target = $region44
        $region43: #{tpu_custom_call.1} parent=39 // pred_region
          %s360 = sand.u32 %s94, 1
          %s361 = scalar_lea.sflag [#allocation4], %s360
          %s362 = sand.u32 %s94, 1
          %s363 = smul.addr %s362, 16
          %s364 = scalar_lea.vmem [#allocation3], %s363
          %365 = dma.done %s361, 256
        $region44: #{tpu_custom_call.1} parent=39 // pred_fallthru
          _
      $region40: #{tpu_custom_call.1} parent=5 // pred_fallthru
        _
    $region6: #{tpu_custom_call.1} parent=1 // loop_footer
      %s16 = sadd.s32 1, %s12
    $region7: #{tpu_custom_call.1} parent=1 // loop_footer_branch
      %11 = sbr.rel target = $region3
    $region8: #{tpu_custom_call.1} parent=1 // loop_exit
      _
    %366 = vsyncpa [#allocation4], 1
    %s367 = scalar_lea.sflag [#allocation4], 1
    %368 = vsyncpa %s367, 1

</llo_original>
